<compile_context>
chip_gen: v7x
topology: tpu7x:2x2x1
jax: 0.10.0
libtpu: 0.0.40
codegen_flags: <defaults>
</compile_context>

<pallas_src>
import functools

import jax
import jax.numpy as jnp
from jax.experimental import pallas as pl
from jax.experimental.pallas import tpu as pltpu


def _cldice_kernel(hw, lane_tile, need_mask,
                   yt_ref, yp_ref, st_ref, sp_ref, out_ref,
                   a_sp_yt, a_sp, a_st_yp, a_st):
    k = pl.program_id(1)                      # spatial (reduction) axis

    @pl.when(k == 0)
    def _init():
        a_sp_yt[...] = jnp.zeros_like(a_sp_yt)
        a_sp[...] = jnp.zeros_like(a_sp)
        a_st_yp[...] = jnp.zeros_like(a_st_yp)
        a_st[...] = jnp.zeros_like(a_st)

    yt = yt_ref[...].astype(jnp.float32)
    yp = jax.nn.sigmoid(yp_ref[...].astype(jnp.float32))   # EUP transcendental
    st = st_ref[...].astype(jnp.float32)
    sp = sp_ref[...].astype(jnp.float32)

    sp_yt = sp * yt
    st_yp = st * yp

    if need_mask:
        # Last spatial tile is ragged: zero out lanes past H*W (their contents
        # are undefined because the inputs are never padded in HBM).
        lane = jax.lax.broadcasted_iota(jnp.int32, sp_yt.shape, 1)
        valid = (k * lane_tile + lane) < hw
        zero = jnp.zeros_like(sp_yt)
        sp_yt = jnp.where(valid, sp_yt, zero)
        st_yp = jnp.where(valid, st_yp, zero)
        sp = jnp.where(valid, sp, zero)
        st = jnp.where(valid, st, zero)

    # Elementwise (VPU-only) accumulation; cross-lane reductions are deferred
    # to the epilogue so the steady state has no XLU work.
    a_sp_yt[...] += sp_yt
    a_sp[...] += sp
    a_st_yp[...] += st_yp
    a_st[...] += st

    @pl.when(k == pl.num_programs(1) - 1)
    def _finalize():
        s_sp_yt = jnp.sum(a_sp_yt[...], axis=-1, keepdims=True)
        s_sp = jnp.sum(a_sp[...], axis=-1, keepdims=True)
        s_st_yp = jnp.sum(a_st_yp[...], axis=-1, keepdims=True)
        s_st = jnp.sum(a_st[...], axis=-1, keepdims=True)
        tprec = (s_sp_yt + 1.0) / (s_sp + 1.0)
        tsens = (s_st_yp + 1.0) / (s_st + 1.0)
        out_ref[...] = 1.0 - 2.0 * (tprec * tsens) / (tprec + tsens)


def cldice_loss(y_true, y_pred, skel_true, skel_pred,
                *, vmem_budget_bytes=16 * 1024 * 1024):
    """Pallas equivalent of my_cldice.forward.  Inputs are NCHW arrays."""
    B, C, H, W = y_true.shape
    bc = B * C
    hw = H * W

    # Contiguous reshape (metadata only, no extra HBM pass, no padding).
    yt = y_true.reshape(bc, hw)
    yp = y_pred.reshape(bc, hw)
    st = skel_true.reshape(bc, hw)
    sp = skel_pred.reshape(bc, hw)
    inputs = (yt, yp, st, sp)

    # --- row (sublane) blocking: split the independent B*C rows into two
    # "parallel" blocks so both TensorCores are used on v7x.  Only done when it
    # divides evenly and keeps sublane tiling legal for every input dtype;
    # otherwise a single full-extent row block (always legal) is used.
    min_row_mult = 8 if all(x.dtype.itemsize == 4 for x in inputs) else 32
    n_row_blocks = 2 if (bc % 2 == 0 and (bc // 2) % min_row_mult == 0) else 1
    row_block = bc // n_row_blocks

    # --- lane (spatial) tile: as large as the VMEM budget allows (bounded),
    # amortizing the ~0.35 us per-grid-step overhead.
    in_bytes = sum(x.dtype.itemsize for x in inputs)
    bytes_per_lane = row_block * (2 * in_bytes + 4 * 4)   # 2x-buffered ins + f32 accs
    lane_tile = max(128, (vmem_budget_bytes // bytes_per_lane) // 128 * 128)
    lane_tile = min(lane_tile, 4096)                      # per-step DMA granularity cap
    lane_tile = min(lane_tile, pl.cdiv(hw, 128) * 128)    # don't exceed rounded H*W
    n_tiles = pl.cdiv(hw, lane_tile)
    need_mask = (hw % lane_tile) != 0

    in_spec = pl.BlockSpec((row_block, lane_tile), lambda r, k: (r, k))

    cl = pl.pallas_call(
        functools.partial(_cldice_kernel, hw, lane_tile, need_mask),
        out_shape=jax.ShapeDtypeStruct((bc, 1), jnp.float32),
        grid_spec=pltpu.PrefetchScalarGridSpec(
            num_scalar_prefetch=0,
            grid=(n_row_blocks, n_tiles),
            in_specs=[in_spec, in_spec, in_spec, in_spec],
            out_specs=pl.BlockSpec((row_block, 1), lambda r, k: (r, 0)),
            scratch_shapes=[pltpu.VMEM((row_block, lane_tile), jnp.float32)] * 4,
        ),
        compiler_params=pltpu.CompilerParams(
            dimension_semantics=("parallel", "arbitrary"),
            vmem_limit_bytes=32 * 1024 * 1024,
        ),
    )(yt, yp, st, sp)

    # Per-(B*C)-row cl_dice values; mean matches torch.mean over dims (B, C).
    return jnp.mean(cl)


def _cldice_ref(y_true, y_pred, skel_true, skel_pred):
    """Pure-JAX reference mirroring the PyTorch module (computed in f32)."""
    y_true = y_true.astype(jnp.float32)
    y_pred = jax.nn.sigmoid(y_pred.astype(jnp.float32))
    skel_true = skel_true.astype(jnp.float32)
    skel_pred = skel_pred.astype(jnp.float32)
    tprec = (jnp.sum(skel_pred * y_true, axis=(2, 3)) + 1.0) / (
        jnp.sum(skel_pred, axis=(2, 3)) + 1.0)
    tsens = (jnp.sum(skel_true * y_pred, axis=(2, 3)) + 1.0) / (
        jnp.sum(skel_true, axis=(2, 3)) + 1.0)
    cl = 1.0 - 2.0 * (tprec * tsens) / (tprec + tsens)
    return jnp.mean(cl)


if __name__ == "__main__":
    key = jax.random.PRNGKey(0)

    def _make(shape, kk, mask_dtype=jnp.float32):
        k1, k2, k3, k4 = jax.random.split(kk, 4)
        y_true = (jax.random.uniform(k1, shape) > 0.5).astype(mask_dtype)
        y_pred = jax.random.normal(k2, shape, dtype=jnp.float32)
        skel_true = (jax.random.uniform(k3, shape) > 0.7).astype(mask_dtype)
        skel_pred = (jax.random.uniform(k4, shape) > 0.7).astype(mask_dtype)
        return y_true, y_pred, skel_true, skel_pred

    k_a, k_b, k_c = jax.random.split(key, 3)
    cases = [
        # (name, inputs)
        ("f32_aligned", _make((2, 4, 16, 16), k_a)),
        # bf16 masks (exact {0,1}) -> half the HBM bytes for 3 of 4 inputs.
        ("bf16_masks", _make((2, 4, 16, 16), k_b, mask_dtype=jnp.bfloat16)),
        # odd shapes: B*C not a multiple of 8, H*W not a multiple of 128
        # -> exercises the no-pad ragged-tile masking path.
        ("f32_ragged", _make((2, 3, 17, 19), k_c)),
    ]

    for name, args in cases:
        loss = jax.block_until_ready(cldice_loss(*args))
        ref = jax.block_until_ready(_cldice_ref(*args))
        assert jnp.allclose(loss, ref, rtol=1e-5, atol=1e-5), (name, loss, ref)

    print("KERNEL_OK")
</pallas_src>

<mosaic_0001>
module attributes {stable_mosaic.version = 11 : i64} {
  func.func @_cldice_kernel(%arg0: i32, %arg1: i32, %arg2: memref<8x256xf32, #tpu.memory_space<vmem>>, %arg3: memref<8x256xf32, #tpu.memory_space<vmem>>, %arg4: memref<8x256xf32, #tpu.memory_space<vmem>>, %arg5: memref<8x256xf32, #tpu.memory_space<vmem>>, %arg6: memref<8x1xf32, #tpu.memory_space<vmem>>, %arg7: memref<8x256xf32, #tpu.memory_space<vmem>>, %arg8: memref<8x256xf32, #tpu.memory_space<vmem>>, %arg9: memref<8x256xf32, #tpu.memory_space<vmem>>, %arg10: memref<8x256xf32, #tpu.memory_space<vmem>>) attributes {dimension_semantics = [#tpu.dimension_semantics<parallel>, #tpu.dimension_semantics<arbitrary>], iteration_bounds = array<i64: 1, 1>, scalar_prefetch = 0 : i64, scratch_operands = 4 : i64, tpu.core_type = #tpu.core_type<tc>, window_params = [{transform_indices = @transform_0, window_bounds = array<i64: 8, 256>}, {transform_indices = @transform_1, window_bounds = array<i64: 8, 256>}, {transform_indices = @transform_2, window_bounds = array<i64: 8, 256>}, {transform_indices = @transform_3, window_bounds = array<i64: 8, 256>}, {transform_indices = @transform_4, window_bounds = array<i64: 8, 1>}]} {
    %c0_i32 = arith.constant 0 : i32
    %0 = arith.cmpi eq, %arg1, %c0_i32 : i32
    %1 = arith.extui %0 : i1 to i32
    %c0_i32_0 = arith.constant 0 : i32
    %2 = arith.cmpi ne, %1, %c0_i32_0 : i32
    scf.if %2 {
      %cst_26 = arith.constant 0.000000e+00 : f32
      %29 = vector.broadcast %cst_26 : f32 to vector<8x256xf32>
      %c0_27 = arith.constant 0 : index
      %c0_28 = arith.constant 0 : index
      %30 = vector.load %arg7[%c0_27, %c0_28] : memref<8x256xf32, #tpu.memory_space<vmem>>, vector<8x256xf32>
      tpu.vector_store %arg7[%c0_27, %c0_28], %29 {strides = array<i32>} : memref<8x256xf32, #tpu.memory_space<vmem>>, vector<8x256xf32>,
      %cst_29 = arith.constant 0.000000e+00 : f32
      %31 = vector.broadcast %cst_29 : f32 to vector<8x256xf32>
      %c0_30 = arith.constant 0 : index
      %c0_31 = arith.constant 0 : index
      %32 = vector.load %arg8[%c0_30, %c0_31] : memref<8x256xf32, #tpu.memory_space<vmem>>, vector<8x256xf32>
      tpu.vector_store %arg8[%c0_30, %c0_31], %31 {strides = array<i32>} : memref<8x256xf32, #tpu.memory_space<vmem>>, vector<8x256xf32>,
      %cst_32 = arith.constant 0.000000e+00 : f32
      %33 = vector.broadcast %cst_32 : f32 to vector<8x256xf32>
      %c0_33 = arith.constant 0 : index
      %c0_34 = arith.constant 0 : index
      %34 = vector.load %arg9[%c0_33, %c0_34] : memref<8x256xf32, #tpu.memory_space<vmem>>, vector<8x256xf32>
      tpu.vector_store %arg9[%c0_33, %c0_34], %33 {strides = array<i32>} : memref<8x256xf32, #tpu.memory_space<vmem>>, vector<8x256xf32>,
      %cst_35 = arith.constant 0.000000e+00 : f32
      %35 = vector.broadcast %cst_35 : f32 to vector<8x256xf32>
      %c0_36 = arith.constant 0 : index
      %c0_37 = arith.constant 0 : index
      %36 = vector.load %arg10[%c0_36, %c0_37] : memref<8x256xf32, #tpu.memory_space<vmem>>, vector<8x256xf32>
      tpu.vector_store %arg10[%c0_36, %c0_37], %35 {strides = array<i32>} : memref<8x256xf32, #tpu.memory_space<vmem>>, vector<8x256xf32>,
    } else {
    }
    %c0 = arith.constant 0 : index
    %c0_1 = arith.constant 0 : index
    %3 = vector.load %arg2[%c0, %c0_1] : memref<8x256xf32, #tpu.memory_space<vmem>>, vector<8x256xf32>
    %c0_2 = arith.constant 0 : index
    %c0_3 = arith.constant 0 : index
    %4 = vector.load %arg3[%c0_2, %c0_3] : memref<8x256xf32, #tpu.memory_space<vmem>>, vector<8x256xf32>
    %5 = arith.negf %4 : vector<8x256xf32>
    %6 = math.exp %5 : vector<8x256xf32>
    %cst = arith.constant 1.000000e+00 : f32
    %7 = vector.broadcast %cst : f32 to vector<8x256xf32>
    %8 = arith.addf %7, %6 : vector<8x256xf32>
    %9 = arith.divf %7, %8 : vector<8x256xf32>
    %c0_4 = arith.constant 0 : index
    %c0_5 = arith.constant 0 : index
    %10 = vector.load %arg4[%c0_4, %c0_5] : memref<8x256xf32, #tpu.memory_space<vmem>>, vector<8x256xf32>
    %c0_6 = arith.constant 0 : index
    %c0_7 = arith.constant 0 : index
    %11 = vector.load %arg5[%c0_6, %c0_7] : memref<8x256xf32, #tpu.memory_space<vmem>>, vector<8x256xf32>
    %12 = arith.mulf %11, %3 : vector<8x256xf32>
    %13 = arith.mulf %10, %9 : vector<8x256xf32>
    %c0_8 = arith.constant 0 : index
    %c0_9 = arith.constant 0 : index
    %14 = vector.load %arg7[%c0_8, %c0_9] : memref<8x256xf32, #tpu.memory_space<vmem>>, vector<8x256xf32>
    %15 = arith.addf %14, %12 : vector<8x256xf32>
    %c0_10 = arith.constant 0 : index
    %c0_11 = arith.constant 0 : index
    %16 = vector.load %arg7[%c0_10, %c0_11] : memref<8x256xf32, #tpu.memory_space<vmem>>, vector<8x256xf32>
    tpu.vector_store %arg7[%c0_10, %c0_11], %15 {strides = array<i32>} : memref<8x256xf32, #tpu.memory_space<vmem>>, vector<8x256xf32>,
    %c0_12 = arith.constant 0 : index
    %c0_13 = arith.constant 0 : index
    %17 = vector.load %arg8[%c0_12, %c0_13] : memref<8x256xf32, #tpu.memory_space<vmem>>, vector<8x256xf32>
    %18 = arith.addf %17, %11 : vector<8x256xf32>
    %c0_14 = arith.constant 0 : index
    %c0_15 = arith.constant 0 : index
    %19 = vector.load %arg8[%c0_14, %c0_15] : memref<8x256xf32, #tpu.memory_space<vmem>>, vector<8x256xf32>
    tpu.vector_store %arg8[%c0_14, %c0_15], %18 {strides = array<i32>} : memref<8x256xf32, #tpu.memory_space<vmem>>, vector<8x256xf32>,
    %c0_16 = arith.constant 0 : index
    %c0_17 = arith.constant 0 : index
    %20 = vector.load %arg9[%c0_16, %c0_17] : memref<8x256xf32, #tpu.memory_space<vmem>>, vector<8x256xf32>
    %21 = arith.addf %20, %13 : vector<8x256xf32>
    %c0_18 = arith.constant 0 : index
    %c0_19 = arith.constant 0 : index
    %22 = vector.load %arg9[%c0_18, %c0_19] : memref<8x256xf32, #tpu.memory_space<vmem>>, vector<8x256xf32>
    tpu.vector_store %arg9[%c0_18, %c0_19], %21 {strides = array<i32>} : memref<8x256xf32, #tpu.memory_space<vmem>>, vector<8x256xf32>,
    %c0_20 = arith.constant 0 : index
    %c0_21 = arith.constant 0 : index
    %23 = vector.load %arg10[%c0_20, %c0_21] : memref<8x256xf32, #tpu.memory_space<vmem>>, vector<8x256xf32>
    %24 = arith.addf %23, %10 : vector<8x256xf32>
    %c0_22 = arith.constant 0 : index
    %c0_23 = arith.constant 0 : index
    %25 = vector.load %arg10[%c0_22, %c0_23] : memref<8x256xf32, #tpu.memory_space<vmem>>, vector<8x256xf32>
    tpu.vector_store %arg10[%c0_22, %c0_23], %24 {strides = array<i32>} : memref<8x256xf32, #tpu.memory_space<vmem>>, vector<8x256xf32>,
    %c0_i32_24 = arith.constant 0 : i32
    %26 = arith.cmpi eq, %arg1, %c0_i32_24 : i32
    %27 = arith.extui %26 : i1 to i32
    %c0_i32_25 = arith.constant 0 : i32
    %28 = arith.cmpi ne, %27, %c0_i32_25 : i32
    scf.if %28 {
      %c0_26 = arith.constant 0 : index
      %c0_27 = arith.constant 0 : index
      %29 = vector.load %arg7[%c0_26, %c0_27] : memref<8x256xf32, #tpu.memory_space<vmem>>, vector<8x256xf32>
      %cst_28 = arith.constant dense<0.000000e+00> : vector<8xf32>
      %30 = vector.multi_reduction <add>, %29, %cst_28 [1] : vector<8x256xf32> to vector<8xf32>
      %31 = vector.shape_cast %30 : vector<8xf32> to vector<8x1xf32>
      %c0_29 = arith.constant 0 : index
      %c0_30 = arith.constant 0 : index
      %32 = vector.load %arg8[%c0_29, %c0_30] : memref<8x256xf32, #tpu.memory_space<vmem>>, vector<8x256xf32>
      %cst_31 = arith.constant dense<0.000000e+00> : vector<8xf32>
      %33 = vector.multi_reduction <add>, %32, %cst_31 [1] : vector<8x256xf32> to vector<8xf32>
      %34 = vector.shape_cast %33 : vector<8xf32> to vector<8x1xf32>
      %c0_32 = arith.constant 0 : index
      %c0_33 = arith.constant 0 : index
      %35 = vector.load %arg9[%c0_32, %c0_33] : memref<8x256xf32, #tpu.memory_space<vmem>>, vector<8x256xf32>
      %cst_34 = arith.constant dense<0.000000e+00> : vector<8xf32>
      %36 = vector.multi_reduction <add>, %35, %cst_34 [1] : vector<8x256xf32> to vector<8xf32>
      %37 = vector.shape_cast %36 : vector<8xf32> to vector<8x1xf32>
      %c0_35 = arith.constant 0 : index
      %c0_36 = arith.constant 0 : index
      %38 = vector.load %arg10[%c0_35, %c0_36] : memref<8x256xf32, #tpu.memory_space<vmem>>, vector<8x256xf32>
      %cst_37 = arith.constant dense<0.000000e+00> : vector<8xf32>
      %39 = vector.multi_reduction <add>, %38, %cst_37 [1] : vector<8x256xf32> to vector<8xf32>
      %40 = vector.shape_cast %39 : vector<8xf32> to vector<8x1xf32>
      %cst_38 = arith.constant 1.000000e+00 : f32
      %41 = vector.broadcast %cst_38 : f32 to vector<8x1xf32>
      %42 = arith.addf %31, %41 : vector<8x1xf32>
      %cst_39 = arith.constant 1.000000e+00 : f32
      %43 = vector.broadcast %cst_39 : f32 to vector<8x1xf32>
      %44 = arith.addf %34, %43 : vector<8x1xf32>
      %45 = arith.divf %42, %44 : vector<8x1xf32>
      %cst_40 = arith.constant 1.000000e+00 : f32
      %46 = vector.broadcast %cst_40 : f32 to vector<8x1xf32>
      %47 = arith.addf %37, %46 : vector<8x1xf32>
      %cst_41 = arith.constant 1.000000e+00 : f32
      %48 = vector.broadcast %cst_41 : f32 to vector<8x1xf32>
      %49 = arith.addf %40, %48 : vector<8x1xf32>
      %50 = arith.divf %47, %49 : vector<8x1xf32>
      %51 = arith.mulf %45, %50 : vector<8x1xf32>
      %cst_42 = arith.constant 2.000000e+00 : f32
      %52 = vector.broadcast %cst_42 : f32 to vector<8x1xf32>
      %53 = arith.mulf %52, %51 : vector<8x1xf32>
      %54 = arith.addf %45, %50 : vector<8x1xf32>
      %55 = arith.divf %53, %54 : vector<8x1xf32>
      %cst_43 = arith.constant 1.000000e+00 : f32
      %56 = vector.broadcast %cst_43 : f32 to vector<8x1xf32>
      %57 = arith.subf %56, %55 : vector<8x1xf32>
      %c0_44 = arith.constant 0 : index
      %c0_45 = arith.constant 0 : index
      %58 = vector.load %arg6[%c0_44, %c0_45] : memref<8x1xf32, #tpu.memory_space<vmem>>, vector<8x1xf32>
      tpu.vector_store %arg6[%c0_44, %c0_45], %57 {strides = array<i32>} : memref<8x1xf32, #tpu.memory_space<vmem>>, vector<8x1xf32>,
    } else {
    }
    return
  }
  func.func @transform_0(%arg0: i32, %arg1: i32) -> (i32, i32) {
    %c0_i32 = arith.constant 0 : i32
    return %arg0, %arg1 : i32, i32
  }
  func.func @transform_1(%arg0: i32, %arg1: i32) -> (i32, i32) {
    %c0_i32 = arith.constant 0 : i32
    return %arg0, %arg1 : i32, i32
  }
  func.func @transform_2(%arg0: i32, %arg1: i32) -> (i32, i32) {
    %c0_i32 = arith.constant 0 : i32
    return %arg0, %arg1 : i32, i32
  }
  func.func @transform_3(%arg0: i32, %arg1: i32) -> (i32, i32) {
    %c0_i32 = arith.constant 0 : i32
    return %arg0, %arg1 : i32, i32
  }
  func.func @transform_4(%arg0: i32, %arg1: i32) -> (i32, i32) {
    %c0_i32 = arith.constant 0 : i32
    %c0_i32_0 = arith.constant 0 : i32
    return %arg0, %c0_i32 : i32, i32
  }
}

</mosaic_0001>

<llo_original>
// kernel: tpu_custom_call.1
$region0: #{tpu_custom_call.1}
  #allocation0 [shape = 'u32[]', space=smem, size = 0x4, offset = 0x4, fixed_abs, tag = 'smem constant byte address 0x4 - core index']
  #allocation1 [shape = 'u32[144,128]{1,0:T(1,128)}', space=vmem, size = 0x12000, scoped, tag = 'internal scratch']
  #allocation2 [shape = 'f32[8,256]{1,0:T(8,128)}', space=vmem, size = 0x2000, scoped, tag = 'scratch operand']
  #allocation3 [shape = 'f32[8,256]{1,0:T(8,128)}', space=vmem, size = 0x2000, scoped, tag = 'scratch operand']
  #allocation4 [shape = 'f32[8,256]{1,0:T(8,128)}', space=vmem, size = 0x2000, scoped, tag = 'scratch operand']
  #allocation5 [shape = 'f32[8,256]{1,0:T(8,128)}', space=vmem, size = 0x2000, scoped, tag = 'scratch operand']
  %s0 = inlined_call_operand.hbm [shape: f32[8,256], index: 0, kind: input, shape index: {}]
  %s1 = inlined_call_operand.hbm [shape: f32[8,256], index: 1, kind: input, shape index: {}]
  %s2 = inlined_call_operand.hbm [shape: f32[8,256], index: 2, kind: input, shape index: {}]
  %s3 = inlined_call_operand.hbm [shape: f32[8,256], index: 3, kind: input, shape index: {}]
  %s4 = inlined_call_operand.vmem [shape: f32[8,1], index: 4, kind: output, shape index: {}]
  %s5 = sld [smem:[#allocation0]]
  $region50: #{tpu_custom_call.1} parent=0
    _
  %s7 = ssub.s32 1, %s5
  %s8 = scalar_select 0, %s7, %s5
  $region1: #{tpu_custom_call.1} parent=0
    #allocation6 [shape = 'u8[8192]{0}', space=vmem, size = 0x2000, scoped, tag = 'input window, operand 0, single buffered']
    #allocation7 [shape = 's32[1]{0}', space=sflag, size = 0x4, scoped, tag = 'scoped memory for tpu_custom_call.1']
    #allocation8 [shape = 'u8[8192]{0}', space=vmem, size = 0x2000, scoped, tag = 'input window, operand 1, single buffered']
    #allocation9 [shape = 's32[1]{0}', space=sflag, size = 0x4, scoped, tag = 'scoped memory for tpu_custom_call.1']
    #allocation10 [shape = 'u8[8192]{0}', space=vmem, size = 0x2000, scoped, tag = 'input window, operand 2, single buffered']
    #allocation11 [shape = 'u8[8192]{0}', space=vmem, size = 0x2000, scoped, tag = 'input window, operand 3, single buffered']
    #allocation12 [shape = 's32[1]{0}', space=sflag, size = 0x4, scoped, tag = 'scoped memory for tpu_custom_call.1']
    %9 = vsyncpa [#allocation7], 0
    %10 = vsyncpa [#allocation9], 0
    %11 = vsyncpa [#allocation12], 0
    // Predicated region
    $region2: #{tpu_custom_call.1} parent=1 // pred_check
      _
    $region3: #{tpu_custom_call.1} parent=1 // pred_check_branch
      %13 = sbr.rel (0) target = $region5
    $region4: #{tpu_custom_call.1} parent=1 // pred_region
      %s15 = ssub.s32 256, 256
      %16 = vsyncadd [#allocation7], %s15
      %s18 = sshll.u32 [#allocation6], 4
      %s19 = int_to_ptr.vmem [resolvable:$true] %s18
      %21 = dma.hbm_to_vmem [thread:$0]  %s0, 256, %s19, [#allocation7]
    $region5: #{tpu_custom_call.1} parent=1 // pred_fallthru
      _
    // Predicated region
    $region6: #{tpu_custom_call.1} parent=1 // pred_check
      _
    $region7: #{tpu_custom_call.1} parent=1 // pred_check_branch
      %23 = sbr.rel (0) target = $region9
    $region8: #{tpu_custom_call.1} parent=1 // pred_region
      %s25 = ssub.s32 256, 256
      %26 = vsyncadd [#allocation9], %s25
      %s28 = sshll.u32 [#allocation8], 4
      %s29 = int_to_ptr.vmem [resolvable:$true] %s28
      %31 = dma.hbm_to_vmem [thread:$0]  %s1, 256, %s29, [#allocation9]
    $region9: #{tpu_custom_call.1} parent=1 // pred_fallthru
      _
    // Predicated region
    $region10: #{tpu_custom_call.1} parent=1 // pred_check
      _
    $region11: #{tpu_custom_call.1} parent=1 // pred_check_branch
      %33 = sbr.rel (0) target = $region13
    $region12: #{tpu_custom_call.1} parent=1 // pred_region
      %s35 = ssub.s32 256, 256
      %36 = vsyncadd [#allocation9], %s35
      %s38 = sshll.u32 [#allocation10], 4
      %s39 = int_to_ptr.vmem [resolvable:$true] %s38
      %41 = dma.hbm_to_vmem [thread:$0]  %s2, 256, %s39, [#allocation9]
    $region13: #{tpu_custom_call.1} parent=1 // pred_fallthru
      _
    // Predicated region
    $region14: #{tpu_custom_call.1} parent=1 // pred_check
      _
    $region15: #{tpu_custom_call.1} parent=1 // pred_check_branch
      %43 = sbr.rel (0) target = $region17
    $region16: #{tpu_custom_call.1} parent=1 // pred_region
      %s45 = ssub.s32 256, 256
      %46 = vsyncadd [#allocation12], %s45
      %s48 = sshll.u32 [#allocation11], 4
      %s49 = int_to_ptr.vmem [resolvable:$true] %s48
      %51 = dma.hbm_to_vmem [thread:$0]  %s3, 256, %s49, [#allocation12]
    $region17: #{tpu_custom_call.1} parent=1 // pred_fallthru
      _
    // Predicated region
    $region18: #{tpu_custom_call.1} parent=1 // pred_check
      _
    $region19: #{tpu_custom_call.1} parent=1 // pred_check_branch
      %53 = sbr.rel (0) target = $region21
    $region20: #{tpu_custom_call.1} parent=1 // pred_region
      %54 = dma.done [#allocation7], 256
    $region21: #{tpu_custom_call.1} parent=1 // pred_fallthru
      _
    // Predicated region
    $region22: #{tpu_custom_call.1} parent=1 // pred_check
      _
    $region23: #{tpu_custom_call.1} parent=1 // pred_check_branch
      %56 = sbr.rel (0) target = $region25
    $region24: #{tpu_custom_call.1} parent=1 // pred_region
      %57 = dma.done [#allocation9], 256
    $region25: #{tpu_custom_call.1} parent=1 // pred_fallthru
      _
    // Predicated region
    $region26: #{tpu_custom_call.1} parent=1 // pred_check
      _
    $region27: #{tpu_custom_call.1} parent=1 // pred_check_branch
      %59 = sbr.rel (0) target = $region29
    $region28: #{tpu_custom_call.1} parent=1 // pred_region
      %60 = dma.done [#allocation9], 256
    $region29: #{tpu_custom_call.1} parent=1 // pred_fallthru
      _
    // Predicated region
    $region30: #{tpu_custom_call.1} parent=1 // pred_check
      _
    $region31: #{tpu_custom_call.1} parent=1 // pred_check_branch
      %62 = sbr.rel (0) target = $region33
    $region32: #{tpu_custom_call.1} parent=1 // pred_region
      %63 = dma.done [#allocation12], 256
    $region33: #{tpu_custom_call.1} parent=1 // pred_fallthru
      _
    %p64 = scmp.eq.s32.totalorder 0, 0
    // Predicated region
    $region34: #{tpu_custom_call.1} parent=1 // pred_check
      %p65 = pneg %p64
    $region35: #{tpu_custom_call.1} parent=1 // pred_check_branch
      %67 = sbr.rel (%p65) target = $region37
    $region36: #{tpu_custom_call.1} parent=1 // pred_region
      %68 = vst [vmem:[#allocation2] sm:$0xff] 0.0
      %69 = vst [vmem:[#allocation2 + $0x8] sm:$0xff] 0.0
      %70 = vst [vmem:[#allocation3] sm:$0xff] 0.0
      %71 = vst [vmem:[#allocation3 + $0x8] sm:$0xff] 0.0
      %72 = vst [vmem:[#allocation4] sm:$0xff] 0.0
      %73 = vst [vmem:[#allocation4 + $0x8] sm:$0xff] 0.0
      %74 = vst [vmem:[#allocation5] sm:$0xff] 0.0
      %75 = vst [vmem:[#allocation5 + $0x8] sm:$0xff] 0.0
    $region37: #{tpu_custom_call.1} parent=1 // pred_fallthru
      _
    %v76 = vld [vmem:[#allocation6] sm:$0xff]
    %v77 = vld [vmem:[#allocation6 + $0x8] sm:$0xff]
    %v78 = vld [vmem:[#allocation8] sm:$0xff]
    %v79 = vld [vmem:[#allocation8 + $0x8] sm:$0xff]
    %v80 = vxor.u32 %v78, 2147483648
    %v81 = vxor.u32 %v79, 2147483648
    %v82 = vmul.f32 %v80, 1.442695
    %v83 = vpow.pop %v82
    %v84 = vmul.f32 %v81, 1.442695
    %v85 = vpow.pop %v84
    %v86 = vadd.f32 %v83, 1.0
    %v87 = vadd.f32 %v85, 1.0
    %v88 = vrcp.pop %v86
    %v89 = vmul.f32 1.0, %v88
    %v90 = vrcp.pop %v87
    %v91 = vmul.f32 1.0, %v90
    %v92 = vld [vmem:[#allocation10] sm:$0xff]
    %v93 = vld [vmem:[#allocation10 + $0x8] sm:$0xff]
    %v94 = vld [vmem:[#allocation11] sm:$0xff]
    %v95 = vld [vmem:[#allocation11 + $0x8] sm:$0xff]
    %v96 = vmul.f32 %v94, %v76
    %v97 = vmul.f32 %v95, %v77
    %v98 = vmul.f32 %v92, %v89
    %v99 = vmul.f32 %v93, %v91
    %v100 = vld [vmem:[#allocation2] sm:$0xff]
    %v101 = vld [vmem:[#allocation2 + $0x8] sm:$0xff]
    %v102 = vadd.f32 %v100, %v96
    %v103 = vadd.f32 %v101, %v97
    %104 = vst [vmem:[#allocation2] sm:$0xff] %v102
    %105 = vst [vmem:[#allocation2 + $0x8] sm:$0xff] %v103
    %v106 = vld [vmem:[#allocation3] sm:$0xff]
    %v107 = vld [vmem:[#allocation3 + $0x8] sm:$0xff]
    %v108 = vadd.f32 %v106, %v94
    %v109 = vadd.f32 %v107, %v95
    %110 = vst [vmem:[#allocation3] sm:$0xff] %v108
    %111 = vst [vmem:[#allocation3 + $0x8] sm:$0xff] %v109
    %v112 = vld [vmem:[#allocation4] sm:$0xff]
    %v113 = vld [vmem:[#allocation4 + $0x8] sm:$0xff]
    %v114 = vadd.f32 %v112, %v98
    %v115 = vadd.f32 %v113, %v99
    %116 = vst [vmem:[#allocation4] sm:$0xff] %v114
    %117 = vst [vmem:[#allocation4 + $0x8] sm:$0xff] %v115
    %v118 = vld [vmem:[#allocation5] sm:$0xff]
    %v119 = vld [vmem:[#allocation5 + $0x8] sm:$0xff]
    %v120 = vadd.f32 %v118, %v92
    %v121 = vadd.f32 %v119, %v93
    %122 = vst [vmem:[#allocation5] sm:$0xff] %v120
    %123 = vst [vmem:[#allocation5 + $0x8] sm:$0xff] %v121
    // Predicated region
    $region38: #{tpu_custom_call.1} parent=1 // pred_check
      %p124 = pneg %p64
    $region39: #{tpu_custom_call.1} parent=1 // pred_check_branch
      %126 = sbr.rel (%p124) target = $region41
    $region40: #{tpu_custom_call.1} parent=1 // pred_region
      %v127 = vld [vmem:[#allocation2] sm:$0xff]
      %v128 = vld [vmem:[#allocation2 + $0x8] sm:$0xff]
      %v129 = vadd.f32 %v127, %v128
      %130 = vadd.xlane.f32.xlu0 %v129
      %v131 = vpop.xlane.xlu0 %130
      %v132 = vld [vmem:[#allocation3] sm:$0xff]
      %v133 = vld [vmem:[#allocation3 + $0x8] sm:$0xff]
      %v134 = vadd.f32 %v132, %v133
      %135 = vadd.xlane.f32.xlu0 %v134
      %v136 = vpop.xlane.xlu0 %135
      %v137 = vld [vmem:[#allocation4] sm:$0xff]
      %v138 = vld [vmem:[#allocation4 + $0x8] sm:$0xff]
      %v139 = vadd.f32 %v137, %v138
      %140 = vadd.xlane.f32.xlu0 %v139
      %v141 = vpop.xlane.xlu0 %140
      %v142 = vld [vmem:[#allocation5] sm:$0xff]
      %v143 = vld [vmem:[#allocation5 + $0x8] sm:$0xff]
      %v144 = vadd.f32 %v142, %v143
      %145 = vadd.xlane.f32.xlu0 %v144
      %v146 = vpop.xlane.xlu0 %145
      %v147 = vadd.f32 %v131, 1.0
      %v148 = vadd.f32 %v136, 1.0
      %v149 = vrcp.pop %v148
      %v150 = vmul.f32 %v147, %v149
      %v151 = vadd.f32 %v141, 1.0
      %v152 = vadd.f32 %v146, 1.0
      %v153 = vrcp.pop %v152
      %v154 = vmul.f32 %v151, %v153
      %v155 = vmul.f32 %v150, %v154
      %v156 = vmul.f32 %v155, 2.0
      %v157 = vadd.f32 %v150, %v154
      %v158 = vrcp.pop %v157
      %v159 = vmul.f32 %v156, %v158
      %v160 = vsub.f32 1.0, %v159
      %vm161 = vcmask 7168
      %162 = vst.msk [vmem:[%s4] sm:$0xff] %vm161, %v160
    $region41: #{tpu_custom_call.1} parent=1 // pred_fallthru
      _
    // Predicated region
    $region42: #{tpu_custom_call.1} parent=1 // pred_check
      _
    $region43: #{tpu_custom_call.1} parent=1 // pred_check_branch
      %164 = sbr.rel (0) target = $region45
    $region44: #{tpu_custom_call.1} parent=1 // pred_region
      _
    $region45: #{tpu_custom_call.1} parent=1 // pred_fallthru
      _
    // Predicated region
    $region46: #{tpu_custom_call.1} parent=1 // pred_check
      _
    $region47: #{tpu_custom_call.1} parent=1 // pred_check_branch
      %166 = sbr.rel (0) target = $region49
    $region48: #{tpu_custom_call.1} parent=1 // pred_region
      _
    $region49: #{tpu_custom_call.1} parent=1 // pred_fallthru
      _
    %167 = vsyncpa [#allocation7], 1
    %168 = vsyncpa [#allocation9], 1
    %169 = vsyncpa [#allocation12], 1

</llo_original>
